<compile_context>
chip_gen: v5e
topology: v5e:2x2
jax: 0.10.0
libtpu: 0.0.40
codegen_flags: <defaults>
</compile_context>

<pallas_src>
import functools

import jax
import jax.numpy as jnp
from jax.experimental import pallas as pl
from jax.experimental.pallas import tpu as pltpu

STATE_DIM = 4    # CartPole-v0 observation_space.shape[0]
HIDDEN = 128
OUT_DIM = 1      # critic value head


def _round_up(x, m):
    return (x + m - 1) // m * m


def critic_kernel(x_ref, w1_ref, b1_ref, w2t_ref, b2_ref, o_ref):
    # x_ref:   (tb, STATE_DIM)      f32
    # w1_ref:  (STATE_DIM, HIDDEN)  f32   b1_ref:  (1, HIDDEN) f32
    # w2t_ref: (1, HIDDEN)          f32   b2_ref:  (1, 1)      f32
    # o_ref:   (tb, OUT_DIM)        f32
    x = x_ref[...]
    w1 = w1_ref[...]

    # Layer 1 (Linear + ReLU): K = 4 is far too small for the MXU, so compute
    # it as 4 rank-1 (column-of-x times row-of-w1) updates on the VPU, in f32.
    h = b1_ref[...] + x[:, 0:1] * w1[0:1, :]
    for k in range(1, STATE_DIM):
        h = h + x[:, k:k + 1] * w1[k:k + 1, :]
    h = jnp.maximum(h, 0.0)

    # Layer 2 (Linear -> scalar value): VPU multiply + XLU cross-lane reduce
    # against the resident transposed weight row (replaces the degenerate
    # N=1 MXU matmul and the extra bf16 recast).
    v = jnp.sum(h * w2t_ref[...], axis=-1, keepdims=True) + b2_ref[...]
    o_ref[...] = v


def prep_critic_params(w1, b1, w2, b2):
    """One-time reshape of the parameters into the kernel's resident layouts
    (hoisted out of the per-call path). No padding is required anymore."""
    w1_r = w1.astype(jnp.float32)                              # (4, 128)
    b1_r = b1.reshape(1, HIDDEN).astype(jnp.float32)           # (1, 128)
    w2t_r = w2.reshape(HIDDEN, OUT_DIM).T.astype(jnp.float32)  # (1, 128)
    b2_r = b2.reshape(1, 1).astype(jnp.float32)                # (1, 1)
    return w1_r, b1_r, w2t_r, b2_r


@functools.partial(jax.jit, static_argnames=("block_b",))
def critic_forward(state, w1_r, b1_r, w2t_r, b2_r, block_b=4096):
    """state: (B, STATE_DIM) float; params from prep_critic_params.
    Returns (B, OUT_DIM) f32 values."""
    B = state.shape[0]
    # One grid step for B <= block_b (overhead-bound regime); multiple
    # "parallel" tiles only when there is enough work to shard.
    tb = min(block_b, _round_up(B, 8))      # batch tile, multiple of 8
    b_pad = _round_up(B, tb)

    x = state.astype(jnp.float32)
    if b_pad != B:                           # pad batch rows only, when needed
        x = jnp.pad(x, ((0, b_pad - B), (0, 0)))

    flops = 2 * b_pad * STATE_DIM * HIDDEN + 2 * b_pad * HIDDEN
    bytes_accessed = 4 * (b_pad * STATE_DIM + b_pad * OUT_DIM
                          + STATE_DIM * HIDDEN + 2 * HIDDEN + 1)

    out_p = pl.pallas_call(
        critic_kernel,
        out_shape=jax.ShapeDtypeStruct((b_pad, OUT_DIM), jnp.float32),
        grid=(b_pad // tb,),
        in_specs=[
            pl.BlockSpec((tb, STATE_DIM), lambda i: (i, 0)),        # state tile
            pl.BlockSpec((STATE_DIM, HIDDEN), lambda i: (0, 0)),    # w1 (resident)
            pl.BlockSpec((1, HIDDEN), lambda i: (0, 0)),            # b1 (resident)
            pl.BlockSpec((1, HIDDEN), lambda i: (0, 0)),            # w2^T (resident)
            pl.BlockSpec((1, 1), lambda i: (0, 0)),                 # b2 (resident)
        ],
        out_specs=pl.BlockSpec((tb, OUT_DIM), lambda i: (i, 0)),
        compiler_params=pltpu.CompilerParams(
            # Batch tiles are independent; with grid=(1,) (the common small-B
            # case) this is a no-op, with many tiles v7x's 2 TCs shard them.
            dimension_semantics=("parallel",)),
        cost_estimate=pl.CostEstimate(
            flops=flops, transcendentals=0, bytes_accessed=bytes_accessed),
    )(x, w1_r, b1_r, w2t_r, b2_r)

    return out_p[:B]


if __name__ == "__main__":
    key = jax.random.PRNGKey(0)
    k_s, k_w1, k_b1, k_w2, k_b2, k_s2 = jax.random.split(key, 6)

    # Deterministic synthetic parameters (shapes from the nn.Linear layers).
    w1 = jax.random.normal(k_w1, (STATE_DIM, HIDDEN), jnp.float32) * 0.1
    b1 = jax.random.normal(k_b1, (HIDDEN,), jnp.float32) * 0.1
    w2 = jax.random.normal(k_w2, (HIDDEN, OUT_DIM), jnp.float32) * 0.1
    b2 = jax.random.normal(k_b2, (OUT_DIM,), jnp.float32) * 0.1

    # One-time parameter prep (out of the hot path).
    params_r = prep_critic_params(w1, b1, w2, b2)

    def reference(s):
        h = jnp.maximum(s @ w1 + b1, 0.0)
        return h @ w2 + b2

    # Small batch (original use-case), a non-multiple-of-8 batch, and a forced
    # multi-tile run to exercise the grid path.
    cases = ((2, k_s, None), (37, k_s2, None), (37, k_s2, 16))
    for batch, ks, blk in cases:
        state = jax.random.normal(ks, (batch, STATE_DIM), jnp.float32)
        if blk is None:
            value = critic_forward(state, *params_r)
        else:
            value = critic_forward(state, *params_r, block_b=blk)
        value = jax.block_until_ready(value)
        ref = reference(state)
        assert value.shape == (batch, OUT_DIM), value.shape
        # All-f32 VPU math -> tight tolerance (no bf16 quantization anymore).
        assert jnp.allclose(value, ref, rtol=1e-4, atol=1e-4), (value, ref)

    print("KERNEL_OK")
</pallas_src>

<mosaic_0001>
module attributes {stable_mosaic.version = 11 : i64} {
  func.func @critic_kernel(%arg0: i32, %arg1: memref<8x4xf32, #tpu.memory_space<vmem>>, %arg2: memref<4x128xf32, #tpu.memory_space<vmem>>, %arg3: memref<1x128xf32, #tpu.memory_space<vmem>>, %arg4: memref<1x128xf32, #tpu.memory_space<vmem>>, %arg5: memref<1x1xf32, #tpu.memory_space<vmem>>, %arg6: memref<8x1xf32, #tpu.memory_space<vmem>>) attributes {dimension_semantics = [#tpu.dimension_semantics<parallel>], iteration_bounds = array<i64: 1>, scalar_prefetch = 0 : i64, scratch_operands = 0 : i64, tpu.core_type = #tpu.core_type<tc>, window_params = [{transform_indices = @transform_0, window_bounds = array<i64: 8, 4>}, {pipeline_mode = #tpu.pipeline_mode<synchronous>, transform_indices = @transform_1, window_bounds = array<i64: 4, 128>}, {pipeline_mode = #tpu.pipeline_mode<synchronous>, transform_indices = @transform_2, window_bounds = array<i64: 1, 128>}, {pipeline_mode = #tpu.pipeline_mode<synchronous>, transform_indices = @transform_3, window_bounds = array<i64: 1, 128>}, {pipeline_mode = #tpu.pipeline_mode<synchronous>, transform_indices = @transform_4, window_bounds = array<i64: 1, 1>}, {transform_indices = @transform_5, window_bounds = array<i64: 8, 1>}]} {
    %c0 = arith.constant 0 : index
    %c0_0 = arith.constant 0 : index
    %0 = vector.load %arg1[%c0, %c0_0] : memref<8x4xf32, #tpu.memory_space<vmem>>, vector<8x4xf32>
    %c0_1 = arith.constant 0 : index
    %c0_2 = arith.constant 0 : index
    %1 = vector.load %arg2[%c0_1, %c0_2] : memref<4x128xf32, #tpu.memory_space<vmem>>, vector<4x128xf32>
    %c0_3 = arith.constant 0 : index
    %c0_4 = arith.constant 0 : index
    %2 = vector.load %arg3[%c0_3, %c0_4] : memref<1x128xf32, #tpu.memory_space<vmem>>, vector<1x128xf32>
    %3 = vector.extract_strided_slice %0 {offsets = [0, 0], sizes = [8, 1], strides = [1, 1]} : vector<8x4xf32> to vector<8x1xf32>
    %4 = vector.extract_strided_slice %1 {offsets = [0, 0], sizes = [1, 128], strides = [1, 1]} : vector<4x128xf32> to vector<1x128xf32>
    %5 = vector.broadcast %3 : vector<8x1xf32> to vector<8x128xf32>
    %6 = vector.broadcast %4 : vector<1x128xf32> to vector<8x128xf32>
    %7 = arith.mulf %5, %6 : vector<8x128xf32>
    %8 = vector.broadcast %2 : vector<1x128xf32> to vector<8x128xf32>
    %9 = arith.addf %8, %7 : vector<8x128xf32>
    %10 = vector.extract_strided_slice %0 {offsets = [0, 1], sizes = [8, 1], strides = [1, 1]} : vector<8x4xf32> to vector<8x1xf32>
    %11 = vector.extract_strided_slice %1 {offsets = [1, 0], sizes = [1, 128], strides = [1, 1]} : vector<4x128xf32> to vector<1x128xf32>
    %12 = vector.broadcast %10 : vector<8x1xf32> to vector<8x128xf32>
    %13 = vector.broadcast %11 : vector<1x128xf32> to vector<8x128xf32>
    %14 = arith.mulf %12, %13 : vector<8x128xf32>
    %15 = arith.addf %9, %14 : vector<8x128xf32>
    %16 = vector.extract_strided_slice %0 {offsets = [0, 2], sizes = [8, 1], strides = [1, 1]} : vector<8x4xf32> to vector<8x1xf32>
    %17 = vector.extract_strided_slice %1 {offsets = [2, 0], sizes = [1, 128], strides = [1, 1]} : vector<4x128xf32> to vector<1x128xf32>
    %18 = vector.broadcast %16 : vector<8x1xf32> to vector<8x128xf32>
    %19 = vector.broadcast %17 : vector<1x128xf32> to vector<8x128xf32>
    %20 = arith.mulf %18, %19 : vector<8x128xf32>
    %21 = arith.addf %15, %20 : vector<8x128xf32>
    %22 = vector.extract_strided_slice %0 {offsets = [0, 3], sizes = [8, 1], strides = [1, 1]} : vector<8x4xf32> to vector<8x1xf32>
    %23 = vector.extract_strided_slice %1 {offsets = [3, 0], sizes = [1, 128], strides = [1, 1]} : vector<4x128xf32> to vector<1x128xf32>
    %24 = vector.broadcast %22 : vector<8x1xf32> to vector<8x128xf32>
    %25 = vector.broadcast %23 : vector<1x128xf32> to vector<8x128xf32>
    %26 = arith.mulf %24, %25 : vector<8x128xf32>
    %27 = arith.addf %21, %26 : vector<8x128xf32>
    %cst = arith.constant 0.000000e+00 : f32
    %28 = vector.broadcast %cst : f32 to vector<8x128xf32>
    %29 = arith.maximumf %27, %28 : vector<8x128xf32>
    %c0_5 = arith.constant 0 : index
    %c0_6 = arith.constant 0 : index
    %30 = vector.load %arg4[%c0_5, %c0_6] : memref<1x128xf32, #tpu.memory_space<vmem>>, vector<1x128xf32>
    %31 = vector.broadcast %30 : vector<1x128xf32> to vector<8x128xf32>
    %32 = arith.mulf %29, %31 : vector<8x128xf32>
    %cst_7 = arith.constant dense<0.000000e+00> : vector<8xf32>
    %33 = vector.multi_reduction <add>, %32, %cst_7 [1] : vector<8x128xf32> to vector<8xf32>
    %34 = vector.shape_cast %33 : vector<8xf32> to vector<8x1xf32>
    %c0_8 = arith.constant 0 : index
    %c0_9 = arith.constant 0 : index
    %35 = vector.load %arg5[%c0_8, %c0_9] : memref<1x1xf32, #tpu.memory_space<vmem>>, vector<1x1xf32>
    %36 = vector.broadcast %35 : vector<1x1xf32> to vector<8x1xf32>
    %37 = arith.addf %34, %36 : vector<8x1xf32>
    %c0_10 = arith.constant 0 : index
    %c0_11 = arith.constant 0 : index
    %38 = vector.load %arg6[%c0_10, %c0_11] : memref<8x1xf32, #tpu.memory_space<vmem>>, vector<8x1xf32>
    tpu.vector_store %arg6[%c0_10, %c0_11], %37 {strides = array<i32>} : memref<8x1xf32, #tpu.memory_space<vmem>>, vector<8x1xf32>,
    return
  }
  func.func @transform_0(%arg0: i32) -> (i32, i32) {
    %c0_i32 = arith.constant 0 : i32
    %c0_i32_0 = arith.constant 0 : i32
    return %arg0, %c0_i32 : i32, i32
  }
  func.func @transform_1(%arg0: i32) -> (i32, i32) {
    %c0_i32 = arith.constant 0 : i32
    %c0_i32_0 = arith.constant 0 : i32
    %c0_i32_1 = arith.constant 0 : i32
    return %c0_i32, %c0_i32_0 : i32, i32
  }
  func.func @transform_2(%arg0: i32) -> (i32, i32) {
    %c0_i32 = arith.constant 0 : i32
    %c0_i32_0 = arith.constant 0 : i32
    %c0_i32_1 = arith.constant 0 : i32
    return %c0_i32, %c0_i32_0 : i32, i32
  }
  func.func @transform_3(%arg0: i32) -> (i32, i32) {
    %c0_i32 = arith.constant 0 : i32
    %c0_i32_0 = arith.constant 0 : i32
    %c0_i32_1 = arith.constant 0 : i32
    return %c0_i32, %c0_i32_0 : i32, i32
  }
  func.func @transform_4(%arg0: i32) -> (i32, i32) {
    %c0_i32 = arith.constant 0 : i32
    %c0_i32_0 = arith.constant 0 : i32
    %c0_i32_1 = arith.constant 0 : i32
    return %c0_i32, %c0_i32_0 : i32, i32
  }
  func.func @transform_5(%arg0: i32) -> (i32, i32) {
    %c0_i32 = arith.constant 0 : i32
    %c0_i32_0 = arith.constant 0 : i32
    return %arg0, %c0_i32 : i32, i32
  }
}

</mosaic_0001>

<llo_original>
// kernel: critic_forward.1
$region0: #{critic_forward.1}
  #allocation0 [shape = 'u32[]', space=smem, size = 0x4, offset = 0x4, fixed_abs, tag = 'smem constant byte address 0x4 - core index']
  #allocation1 [shape = 'u32[72,128]{1,0:T(1,128)}', space=vmem, size = 0x9000, scoped, tag = 'internal scratch']
  #allocation2 [shape = 'f32[1,1]{1,0:T(1,128)S(1)}', space=vmem, size = 0x200, scoped, tag = 'scoped memory for critic_forward.1']
  %s0 = inlined_call_operand.vmem [shape: f32[8,4], index: 0, kind: input, shape index: {}]
  %s1 = inlined_call_operand.vmem [shape: f32[4,128], index: 1, kind: input, shape index: {}]
  %s2 = inlined_call_operand.vmem [shape: f32[1,128], index: 2, kind: input, shape index: {}]
  %s3 = inlined_call_operand.vmem [shape: f32[1,128], index: 3, kind: input, shape index: {}]
  %s4 = inlined_call_operand.<no memory space> [shape: f32[1,1], index: 4, kind: input, shape index: {}]
  %s5 = inlined_call_operand.vmem [shape: f32[8,1], index: 5, kind: output, shape index: {}]
  %s6 = sld [smem:[#allocation0]]
  $region30: #{critic_forward.1} parent=0
    _
  %s8 = ssub.s32 1, %s6
  %s9 = scalar_select 0, %s8, %s6
  %v10 = vstv %s4
  %11 = vst [vmem:[#allocation2] sm:$0x1] %v10
  // Predicated region
  $region2: #{critic_forward.1} parent=0 // pred_check
    _
  $region3: #{critic_forward.1} parent=0 // pred_check_branch
    %13 = sbr.rel (0) target = $region5
  $region4: #{critic_forward.1} parent=0 // pred_region
    _
  $region5: #{critic_forward.1} parent=0 // pred_fallthru
    _
  // Predicated region
  $region6: #{critic_forward.1} parent=0 // pred_check
    _
  $region7: #{critic_forward.1} parent=0 // pred_check_branch
    %15 = sbr.rel (0) target = $region9
  $region8: #{critic_forward.1} parent=0 // pred_region
    _
  $region9: #{critic_forward.1} parent=0 // pred_fallthru
    _
  // Predicated region
  $region10: #{critic_forward.1} parent=0 // pred_check
    _
  $region11: #{critic_forward.1} parent=0 // pred_check_branch
    %17 = sbr.rel (0) target = $region13
  $region12: #{critic_forward.1} parent=0 // pred_region
    _
  $region13: #{critic_forward.1} parent=0 // pred_fallthru
    _
  // Predicated region
  $region14: #{critic_forward.1} parent=0 // pred_check
    _
  $region15: #{critic_forward.1} parent=0 // pred_check_branch
    %19 = sbr.rel (0) target = $region17
  $region16: #{critic_forward.1} parent=0 // pred_region
    _
  $region17: #{critic_forward.1} parent=0 // pred_fallthru
    _
  // Predicated region
  $region18: #{critic_forward.1} parent=0 // pred_check
    _
  $region19: #{critic_forward.1} parent=0 // pred_check_branch
    %21 = sbr.rel (0) target = $region21
  $region20: #{critic_forward.1} parent=0 // pred_region
    _
  $region21: #{critic_forward.1} parent=0 // pred_fallthru
    _
  %v22 = vld [vmem:[%s0] sm:$0xff]
  %v23 = vld [vmem:[%s1] sm:$0xf]
  %v24 = vld [vmem:[%s2] sm:$0x1]
  %26 = vset.pattern.permute.xlu0 0
  %27 = vperm.xlu0 %26, %v22
  %v28 = vpop.permute.xlu0 %27
  %v30 = vperm.slane %v23, 0
  %v31 = vmul.f32 %v28, %v30
  %v33 = vperm.slane %v24, 0
  %v35 = vadd.f32 %v33, %v31
  %36 = vset.pattern.permute.xlu0 1
  %37 = vperm.xlu0 %36, %v22
  %v38 = vpop.permute.xlu0 %37
  %v40 = vperm.slane %v23, 1
  %v41 = vmul.f32 %v38, %v40
  %v42 = vadd.f32 %v35, %v41
  %43 = vset.pattern.permute.xlu0 2
  %44 = vperm.xlu0 %43, %v22
  %v45 = vpop.permute.xlu0 %44
  %v47 = vperm.slane %v23, 2
  %v48 = vmul.f32 %v45, %v47
  %v49 = vadd.f32 %v42, %v48
  %50 = vset.pattern.permute.xlu0 3
  %51 = vperm.xlu0 %50, %v22
  %v52 = vpop.permute.xlu0 %51
  %v54 = vperm.slane %v23, 3
  %v55 = vmul.f32 %v52, %v54
  %v56 = vadd.f32 %v49, %v55
  %v57 = vmax.f32 %v56, 0.0
  %v58 = vld [vmem:[%s3] sm:$0x1]
  %v60 = vperm.slane %v58, 0
  %v62 = vmul.f32 %v57, %v60
  %63 = vadd.xlane.f32.xlu0 %v62
  %v64 = vpop.xlane.xlu0 %63
  %v65 = vld [vmem:[#allocation2] sm:$0x1]
  %v67 = vperm.slane %v65, 0
  %v69 = vadd.f32 %v64, %v67
  %vm70 = vcmask 7168
  %71 = vst.msk [vmem:[%s5] sm:$0xff] %vm70, %v69
  // Predicated region
  $region22: #{critic_forward.1} parent=0 // pred_check
    _
  $region23: #{critic_forward.1} parent=0 // pred_check_branch
    %73 = sbr.rel (0) target = $region25
  $region24: #{critic_forward.1} parent=0 // pred_region
    _
  $region25: #{critic_forward.1} parent=0 // pred_fallthru
    _
  // Predicated region
  $region26: #{critic_forward.1} parent=0 // pred_check
    _
  $region27: #{critic_forward.1} parent=0 // pred_check_branch
    %75 = sbr.rel (0) target = $region29
  $region28: #{critic_forward.1} parent=0 // pred_region
    _
  $region29: #{critic_forward.1} parent=0 // pred_fallthru
    _

</llo_original>
